<compile_context>
chip_gen: v6e
topology: v6e:2x2x1
jax: 0.10.0
libtpu: 0.0.40
codegen_flags: <defaults>
</compile_context>

<pallas_src>
import math
import functools

import numpy as np
import jax
import jax.numpy as jnp
from jax.experimental import pallas as pl
from jax.experimental.pallas import tpu as pltpu

# ---------------- model config (small, consistent with the module) ----------------
EMBED_DIM = 32
NUM_HEADS = 4
CONTEXT_LENGTH = 8
BATCH = 2


def _causal_attn_kernel(x_ref, w_ref, c_ref, o_ref, *, num_heads):
    """Single invocation; everything resident in VMEM.

    x_ref: (BT, D)        f32 flattened input (batch folded into rows)
    w_ref: (2*NH, D, D)   bf16; [0:NH]   = A_h = Wq_h Wk_h^T / sqrt(DH)
                                [NH:2NH] = B_h = Wv_h Wout_h
    c_ref: (BT+1, W)      f32;  [:BT, :BT] = additive block-diag causal bias
                                [BT, :D]   = output-projection bias
    o_ref: (BT, D)        f32 output
    """
    x = x_ref[...]                                   # (BT, D) f32
    BT, D = x.shape
    NH = num_heads

    # One bf16 copy of x, broadcast over the head axis so every contraction
    # below is a plain head-batched matmul (no per-head slicing anywhere).
    xh = jnp.broadcast_to(x.astype(jnp.bfloat16)[None], (NH, BT, D))

    a = w_ref[0:NH]                                  # (NH, D, D) score weights
    b = w_ref[NH:2 * NH]                             # (NH, D, D) value->output weights

    # Scores: s_h = x A_h x^T  (two depth-D contractions, f32 accumulation).
    u = jnp.einsum("hqD,hDE->hqE", xh, a,
                   preferred_element_type=jnp.float32).astype(jnp.bfloat16)
    s = jnp.einsum("hqE,hkE->hqk", u, xh,
                   preferred_element_type=jnp.float32)           # (NH, BT, BT)

    # Precomputed block-diagonal causal additive bias (0 / -1e30), f32.
    c = c_ref[...]                                   # (BT+1, W) f32
    s = s + c[0:BT, 0:BT][None]

    # Numerically-stable softmax, all in f32 (exact divide; tiny tensor).
    m = jnp.max(s, axis=-1, keepdims=True)
    p = jnp.exp(s - m)
    p = p / jnp.sum(p, axis=-1, keepdims=True)
    # TODO(synk): attn_dropout / output_dropout have no Pallas equivalent here;
    # treated as eval-mode identities (matches module.eval() semantics).

    # Values already projected through the output matrix: vo_h = x (Wv_h Wout_h).
    vo = jnp.einsum("hkD,hDE->hkE", xh, b,
                    preferred_element_type=jnp.float32).astype(jnp.bfloat16)
    o = jnp.einsum("hqk,hkE->hqE", p.astype(jnp.bfloat16), vo,
                   preferred_element_type=jnp.float32)           # (NH, BT, D)

    # Head merge is just a sum over the (major) head axis; add output bias.
    out = jnp.sum(o, axis=0) + c[BT:BT + 1, 0:D]
    o_ref[...] = out.astype(o_ref.dtype)


def prepare_params(w_qkv, w_out, b_out, *, num_heads, batch, seq_len):
    """One-time constant reparameterisation of the module's weights.

    Returns:
      w_heads: (2*NH, D, D) bf16 -- A_h = Wq_h Wk_h^T / sqrt(DH) stacked with
               B_h = Wv_h Wout_h.
      consts:  (B*T+1, max(D, B*T)) f32 -- block-diag causal additive bias in
               the top-left (B*T, B*T) corner, output bias in the last row.
    """
    D = w_qkv.shape[0]
    NH, DH = num_heads, D // num_heads
    scale = 1.0 / math.sqrt(DH)

    wq = w_qkv[:, 0 * D:1 * D].reshape(D, NH, DH)
    wk = w_qkv[:, 1 * D:2 * D].reshape(D, NH, DH)
    wv = w_qkv[:, 2 * D:3 * D].reshape(D, NH, DH)
    wo = w_out.reshape(NH, DH, D)

    a = jnp.einsum("Dhd,Ehd->hDE", wq, wk) * scale      # (NH, D, D)
    b = jnp.einsum("Dhd,hdE->hDE", wv, wo)              # (NH, D, D)
    w_heads = jnp.concatenate([a, b], axis=0).astype(jnp.bfloat16)

    BT = batch * seq_len
    W = max(D, BT)
    r = np.arange(BT)[:, None]
    c = np.arange(BT)[None, :]
    allowed = (r // seq_len == c // seq_len) & (c <= r)   # same batch & causal
    consts_np = np.zeros((BT + 1, W), np.float32)
    consts_np[:BT, :BT] = np.where(allowed, 0.0, -1e30)
    consts = jnp.asarray(consts_np).at[BT, :D].set(
        jnp.ravel(b_out).astype(jnp.float32))
    return w_heads, consts


@functools.partial(jax.jit, static_argnames=("num_heads",))
def causal_self_attention(x, w_heads, consts, *, num_heads):
    """x: (B, T, D); w_heads/consts from prepare_params (same B, T)."""
    B, T, D = x.shape
    x2 = x.reshape(B * T, D)                         # free contiguous HBM reshape

    kernel = functools.partial(_causal_attn_kernel, num_heads=num_heads)
    vmem = lambda: pl.BlockSpec(memory_space=pltpu.MemorySpace.VMEM)

    out2 = pl.pallas_call(
        kernel,
        out_shape=jax.ShapeDtypeStruct((B * T, D), x.dtype),
        in_specs=[vmem(), vmem(), vmem()],
        out_specs=vmem(),
    )(x2, w_heads, consts)

    return out2.reshape(B, T, D)                     # free contiguous HBM reshape


def _reference(x, w_qkv, w_out, b_out, num_heads):
    """Pure-JAX f32 reference mirroring the PyTorch forward (eval mode)."""
    B, T, D = x.shape
    DH = D // num_heads
    qkv = x @ w_qkv                                                   # (B, T, 3D)
    q, k, v = jnp.split(qkv, 3, axis=-1)

    def heads(t):
        return t.reshape(B, T, num_heads, DH).transpose(0, 2, 1, 3)   # (B, NH, T, DH)

    q, k, v = heads(q), heads(k), heads(v)
    att = (q @ k.transpose(0, 1, 3, 2)) / math.sqrt(DH)               # (B, NH, T, T)
    mask = jnp.tril(jnp.ones((T, T), dtype=bool))
    att = jnp.where(mask[None, None], att, -jnp.inf)
    att = jax.nn.softmax(att, axis=-1)
    y = att @ v                                                       # (B, NH, T, DH)
    y = y.transpose(0, 2, 1, 3).reshape(B, T, D)
    return y @ w_out + b_out


if __name__ == "__main__":
    key = jax.random.PRNGKey(0)
    k_x, k_qkv, k_out, k_b = jax.random.split(key, 4)

    D = EMBED_DIM
    x = jax.random.normal(k_x, (BATCH, CONTEXT_LENGTH, D), dtype=jnp.float32)

    # Deterministic parameter init (uniform, roughly matching nn.Linear scaling).
    bound = 1.0 / math.sqrt(D)
    w_qkv = jax.random.uniform(k_qkv, (D, 3 * D), minval=-bound, maxval=bound,
                               dtype=jnp.float32)
    w_out = jax.random.uniform(k_out, (D, D), minval=-bound, maxval=bound,
                               dtype=jnp.float32)
    b_out = jax.random.uniform(k_b, (1, D), minval=-bound, maxval=bound,
                               dtype=jnp.float32)

    # One-time weight preparation (constant transform, not a per-call cost).
    w_heads, consts = prepare_params(w_qkv, w_out, b_out, num_heads=NUM_HEADS,
                                     batch=BATCH, seq_len=CONTEXT_LENGTH)

    y = causal_self_attention(x, w_heads, consts, num_heads=NUM_HEADS)
    y = jax.block_until_ready(y)

    y_ref = _reference(x, w_qkv, w_out, b_out, NUM_HEADS)
    assert y.shape == (BATCH, CONTEXT_LENGTH, D)
    # Tolerance accounts for bf16 MXU operands (softmax itself is exact f32);
    # expected max abs error is ~5e-3 at these scales, real bugs are O(0.1+).
    max_err = float(jnp.max(jnp.abs(y - y_ref)))
    assert jnp.allclose(y, y_ref, atol=2e-2, rtol=2e-2), (
        "mismatch vs reference (max abs err %.3e)" % max_err)

    print("KERNEL_OK")
</pallas_src>

<mosaic_0001>
module attributes {stable_mosaic.version = 11 : i64} {
  func.func @_causal_attn_kernel(%arg0: memref<16x32xf32, #tpu.memory_space<vmem>>, %arg1: memref<8x32x32xbf16, #tpu.memory_space<vmem>>, %arg2: memref<17x32xf32, #tpu.memory_space<vmem>>, %arg3: memref<16x32xf32, #tpu.memory_space<vmem>>) attributes {dimension_semantics = [], scalar_prefetch = 0 : i64, scratch_operands = 0 : i64, tpu.core_type = #tpu.core_type<tc>} {
    %c0 = arith.constant 0 : index
    %c0_0 = arith.constant 0 : index
    %0 = vector.load %arg0[%c0, %c0_0] : memref<16x32xf32, #tpu.memory_space<vmem>>, vector<16x32xf32>
    %1 = arith.truncf %0 : vector<16x32xf32> to vector<16x32xbf16>
    %2 = vector.shape_cast %1 : vector<16x32xbf16> to vector<1x16x32xbf16>
    %3 = vector.shape_cast %2 : vector<1x16x32xbf16> to vector<1x16x32xbf16>
    %4 = vector.broadcast %3 : vector<1x16x32xbf16> to vector<4x16x32xbf16>
    %c0_1 = arith.constant 0 : index
    %c0_2 = arith.constant 0 : index
    %c0_3 = arith.constant 0 : index
    %5 = vector.load %arg1[%c0_1, %c0_2, %c0_3] : memref<8x32x32xbf16, #tpu.memory_space<vmem>>, vector<4x32x32xbf16>
    %c4 = arith.constant 4 : index
    %c0_4 = arith.constant 0 : index
    %c0_5 = arith.constant 0 : index
    %6 = vector.load %arg1[%c4, %c0_4, %c0_5] : memref<8x32x32xbf16, #tpu.memory_space<vmem>>, vector<4x32x32xbf16>
    "tpu.trace_start"() <{level = 10 : i32, message = "hqD,hDE->hqE"}> : () -> ()
    %cst = arith.constant dense<0.000000e+00> : vector<4x16x32xf32>
    %7 = tpu.matmul %4, %5, %cst {dimension_numbers = #tpu.dot_dimension_numbers<[2], [1], [1], [2], [0, 0, 0, 1, 1, 2], [0], [0]>} : vector<4x16x32xbf16>, vector<4x32x32xbf16>, vector<4x16x32xf32> -> vector<4x16x32xf32>
    "tpu.trace_stop"() : () -> ()
    %8 = arith.truncf %7 : vector<4x16x32xf32> to vector<4x16x32xbf16>
    "tpu.trace_start"() <{level = 10 : i32, message = "hqE,hkE->hqk"}> : () -> ()
    %cst_6 = arith.constant dense<0.000000e+00> : vector<4x16x16xf32>
    %9 = tpu.matmul %8, %4, %cst_6 {dimension_numbers = #tpu.dot_dimension_numbers<[2], [2], [1], [1], [0, 0, 0, 1, 1, 1], [0], [0]>} : vector<4x16x32xbf16>, vector<4x16x32xbf16>, vector<4x16x16xf32> -> vector<4x16x16xf32>
    "tpu.trace_stop"() : () -> ()
    %c0_7 = arith.constant 0 : index
    %c0_8 = arith.constant 0 : index
    %10 = vector.load %arg2[%c0_7, %c0_8] : memref<17x32xf32, #tpu.memory_space<vmem>>, vector<17x32xf32>
    %11 = vector.extract_strided_slice %10 {offsets = [0, 0], sizes = [16, 16], strides = [1, 1]} : vector<17x32xf32> to vector<16x16xf32>
    %12 = vector.shape_cast %11 : vector<16x16xf32> to vector<1x16x16xf32>
    %13 = vector.broadcast %12 : vector<1x16x16xf32> to vector<4x16x16xf32>
    %14 = arith.addf %9, %13 : vector<4x16x16xf32>
    %cst_9 = arith.constant dense<0xFF800000> : vector<4x16xf32>
    %15 = vector.multi_reduction <maximumf>, %14, %cst_9 [2] : vector<4x16x16xf32> to vector<4x16xf32>
    %16 = vector.shape_cast %15 : vector<4x16xf32> to vector<4x16x1xf32>
    %17 = vector.broadcast %16 : vector<4x16x1xf32> to vector<4x16x16xf32>
    %18 = arith.subf %14, %17 : vector<4x16x16xf32>
    %19 = math.exp %18 : vector<4x16x16xf32>
    %cst_10 = arith.constant dense<0.000000e+00> : vector<4x16xf32>
    %20 = vector.multi_reduction <add>, %19, %cst_10 [2] : vector<4x16x16xf32> to vector<4x16xf32>
    %21 = vector.shape_cast %20 : vector<4x16xf32> to vector<4x16x1xf32>
    %22 = vector.broadcast %21 : vector<4x16x1xf32> to vector<4x16x16xf32>
    %23 = arith.divf %19, %22 : vector<4x16x16xf32>
    "tpu.trace_start"() <{level = 10 : i32, message = "hkD,hDE->hkE"}> : () -> ()
    %cst_11 = arith.constant dense<0.000000e+00> : vector<4x16x32xf32>
    %24 = tpu.matmul %4, %6, %cst_11 {dimension_numbers = #tpu.dot_dimension_numbers<[2], [1], [1], [2], [0, 0, 0, 1, 1, 2], [0], [0]>} : vector<4x16x32xbf16>, vector<4x32x32xbf16>, vector<4x16x32xf32> -> vector<4x16x32xf32>
    "tpu.trace_stop"() : () -> ()
    %25 = arith.truncf %24 : vector<4x16x32xf32> to vector<4x16x32xbf16>
    %26 = arith.truncf %23 : vector<4x16x16xf32> to vector<4x16x16xbf16>
    "tpu.trace_start"() <{level = 10 : i32, message = "hqk,hkE->hqE"}> : () -> ()
    %cst_12 = arith.constant dense<0.000000e+00> : vector<4x16x32xf32>
    %27 = tpu.matmul %26, %25, %cst_12 {dimension_numbers = #tpu.dot_dimension_numbers<[2], [1], [1], [2], [0, 0, 0, 1, 1, 2], [0], [0]>} : vector<4x16x16xbf16>, vector<4x16x32xbf16>, vector<4x16x32xf32> -> vector<4x16x32xf32>
    "tpu.trace_stop"() : () -> ()
    %cst_13 = arith.constant dense<0.000000e+00> : vector<16x32xf32>
    %28 = vector.multi_reduction <add>, %27, %cst_13 [0] : vector<4x16x32xf32> to vector<16x32xf32>
    %29 = vector.extract_strided_slice %10 {offsets = [16, 0], sizes = [1, 32], strides = [1, 1]} : vector<17x32xf32> to vector<1x32xf32>
    %30 = vector.broadcast %29 : vector<1x32xf32> to vector<16x32xf32>
    %31 = arith.addf %28, %30 : vector<16x32xf32>
    %c0_14 = arith.constant 0 : index
    %c0_15 = arith.constant 0 : index
    %32 = vector.load %arg3[%c0_14, %c0_15] : memref<16x32xf32, #tpu.memory_space<vmem>>, vector<16x32xf32>
    tpu.vector_store %arg3[%c0_14, %c0_15], %31 {strides = array<i32>} : memref<16x32xf32, #tpu.memory_space<vmem>>, vector<16x32xf32>,
    return
  }
}

</mosaic_0001>

<llo_original>
// kernel: causal_self_attention.1
$region0: #{causal_self_attention.1}
  #allocation0 [shape = 'u32[]', space=smem, size = 0x4, offset = 0x4, fixed_abs, tag = 'smem constant byte address 0x4 - core index']
  #allocation1 [shape = 'u32[144,128]{1,0:T(1,128)}', space=vmem, size = 0x12000, scoped, tag = 'internal scratch']
  %s0 = inlined_call_operand.hbm [shape: f32[16,32], index: 0, kind: input, shape index: {}]
  %s1 = inlined_call_operand.hbm [shape: bf16[8,32,32], index: 1, kind: input, shape index: {}]
  %s2 = inlined_call_operand.hbm [shape: f32[17,32], index: 2, kind: input, shape index: {}]
  %s3 = inlined_call_operand.hbm [shape: f32[16,32], index: 3, kind: output, shape index: {}]
  %s4 = sld [smem:[#allocation0]]
  $region34: #{causal_self_attention.1} parent=0
    _
  %s6 = ssub.s32 1, %s4
  %s7 = scalar_select 0, %s6, %s4
  $region1: #{causal_self_attention.1} parent=0
    #allocation2 [shape = 'u8[8192]{0}', space=vmem, size = 0x2000, scoped, tag = 'input window, operand 0, single buffered']
    #allocation3 [shape = 's32[1]{0}', space=sflag, size = 0x4, scoped, tag = 'scoped memory for causal_self_attention.1']
    #allocation4 [shape = 's32[1]{0}', space=sflag, size = 0x4, scoped, tag = 'scoped memory for causal_self_attention.1']
    #allocation5 [shape = 'u8[65536]{0}', space=vmem, size = 0x10000, scoped, tag = 'input window, operand 1, single buffered']
    #allocation6 [shape = 's32[1]{0}', space=sflag, size = 0x4, scoped, tag = 'scoped memory for causal_self_attention.1']
    #allocation7 [shape = 'u8[12288]{0}', space=vmem, size = 0x3000, scoped, tag = 'input window, operand 2, single buffered']
    #allocation8 [shape = 'u8[8192]{0}', space=vmem, size = 0x2000, scoped, tag = 'output window, operand 0, single buffered']
    %8 = vsyncpa [#allocation3], 0
    %9 = vsyncpa [#allocation6], 0
    %10 = vsyncpa [#allocation4], 0
    // Predicated region
    $region2: #{causal_self_attention.1} parent=1 // pred_check
      _
    $region3: #{causal_self_attention.1} parent=1 // pred_check_branch
      %12 = sbr.rel (0) target = $region5
    $region4: #{causal_self_attention.1} parent=1 // pred_region
      %s14 = ssub.s32 256, 256
      %15 = vsyncadd [#allocation3], %s14
      %s16 = sshll.u32 [#allocation2], 4
      %s17 = int_to_ptr.vmem [resolvable:$true] %s16
      %22 = dma.hbm_to_vmem [thread:$0]  %s0, 256, %s17, [#allocation3], 128, 128, 8
    $region5: #{causal_self_attention.1} parent=1 // pred_fallthru
      _
    // Predicated region
    $region6: #{causal_self_attention.1} parent=1 // pred_check
      _
    $region7: #{causal_self_attention.1} parent=1 // pred_check_branch
      %24 = sbr.rel (0) target = $region9
    $region8: #{causal_self_attention.1} parent=1 // pred_region
      %s26 = ssub.s32 2048, 2048
      %27 = vsyncadd [#allocation6], %s26
      %s28 = sshll.u32 [#allocation5], 4
      %s29 = int_to_ptr.vmem [resolvable:$true] %s28
      %34 = dma.hbm_to_vmem [thread:$0]  %s1, 2048, %s29, [#allocation6], 64, 64, 4
    $region9: #{causal_self_attention.1} parent=1 // pred_fallthru
      _
    // Predicated region
    $region10: #{causal_self_attention.1} parent=1 // pred_check
      _
    $region11: #{causal_self_attention.1} parent=1 // pred_check_branch
      %36 = sbr.rel (0) target = $region13
    $region12: #{causal_self_attention.1} parent=1 // pred_region
      %s38 = ssub.s32 384, 384
      %39 = vsyncadd [#allocation6], %s38
      %s40 = sshll.u32 [#allocation7], 4
      %s41 = int_to_ptr.vmem [resolvable:$true] %s40
      %46 = dma.hbm_to_vmem [thread:$0]  %s2, 384, %s41, [#allocation6], 128, 128, 8
    $region13: #{causal_self_attention.1} parent=1 // pred_fallthru
      _
    // Predicated region
    $region14: #{causal_self_attention.1} parent=1 // pred_check
      _
    $region15: #{causal_self_attention.1} parent=1 // pred_check_branch
      %48 = sbr.rel (0) target = $region17
    $region16: #{causal_self_attention.1} parent=1 // pred_region
      %49 = dma.done [#allocation3], 256
    $region17: #{causal_self_attention.1} parent=1 // pred_fallthru
      _
    // Predicated region
    $region18: #{causal_self_attention.1} parent=1 // pred_check
      _
    $region19: #{causal_self_attention.1} parent=1 // pred_check_branch
      %51 = sbr.rel (0) target = $region21
    $region20: #{causal_self_attention.1} parent=1 // pred_region
      %52 = dma.done [#allocation6], 2048
    $region21: #{causal_self_attention.1} parent=1 // pred_fallthru
      _
    // Predicated region
    $region22: #{causal_self_attention.1} parent=1 // pred_check
      _
    $region23: #{causal_self_attention.1} parent=1 // pred_check_branch
      %54 = sbr.rel (0) target = $region25
    $region24: #{causal_self_attention.1} parent=1 // pred_region
      %55 = dma.done [#allocation6], 384
    $region25: #{causal_self_attention.1} parent=1 // pred_fallthru
      _
    %v57 = vld [vmem:[#allocation2] sm:$0xff]
    %v58 = vld [vmem:[#allocation2 + $0x8] sm:$0xff]
    %v59 = vpack.c.bf16 %v58, %v57
    %v60 = vld [vmem:[#allocation5] sm:$0xf]
    %v61 = vld [vmem:[#allocation5 + $0x4] sm:$0xf]
    %v62 = vld [vmem:[#allocation5 + $0x8] sm:$0xf]
    %v63 = vld [vmem:[#allocation5 + $0xc] sm:$0xf]
    %v64 = vld [vmem:[#allocation5 + $0x10] sm:$0xf]
    %v65 = vld [vmem:[#allocation5 + $0x14] sm:$0xf]
    %v66 = vld [vmem:[#allocation5 + $0x18] sm:$0xf]
    %v67 = vld [vmem:[#allocation5 + $0x1c] sm:$0xf]
    %v68 = vld [vmem:[#allocation5 + $0x20] sm:$0xf]
    %v69 = vld [vmem:[#allocation5 + $0x24] sm:$0xf]
    %v70 = vld [vmem:[#allocation5 + $0x28] sm:$0xf]
    %v71 = vld [vmem:[#allocation5 + $0x2c] sm:$0xf]
    %v72 = vld [vmem:[#allocation5 + $0x30] sm:$0xf]
    %v73 = vld [vmem:[#allocation5 + $0x34] sm:$0xf]
    %v74 = vld [vmem:[#allocation5 + $0x38] sm:$0xf]
    %v75 = vld [vmem:[#allocation5 + $0x3c] sm:$0xf]
    %s76 = scalar_lea.vmem [#allocation5], 64
    %v77 = vld [vmem:[%s76] sm:$0xf]
    %v78 = vld [vmem:[%s76 + $0x4] sm:$0xf]
    %v79 = vld [vmem:[%s76 + $0x8] sm:$0xf]
    %v80 = vld [vmem:[%s76 + $0xc] sm:$0xf]
    %v81 = vld [vmem:[%s76 + $0x10] sm:$0xf]
    %v82 = vld [vmem:[%s76 + $0x14] sm:$0xf]
    %v83 = vld [vmem:[%s76 + $0x18] sm:$0xf]
    %v84 = vld [vmem:[%s76 + $0x1c] sm:$0xf]
    %v85 = vld [vmem:[%s76 + $0x20] sm:$0xf]
    %v86 = vld [vmem:[%s76 + $0x24] sm:$0xf]
    %v87 = vld [vmem:[%s76 + $0x28] sm:$0xf]
    %v88 = vld [vmem:[%s76 + $0x2c] sm:$0xf]
    %v89 = vld [vmem:[%s76 + $0x30] sm:$0xf]
    %v90 = vld [vmem:[%s76 + $0x34] sm:$0xf]
    %v91 = vld [vmem:[%s76 + $0x38] sm:$0xf]
    %v92 = vld [vmem:[%s76 + $0x3c] sm:$0xf]
    %v97 = vunpack.c.l.b16 %v60
    %v98 = vunpack.c.l.b16 %v61
    %v99 = vunpack.c.l.b16 %v62
    %v100 = vunpack.c.l.b16 %v63
    %v101 = vpack.c.b16 %v98, %v97
    %v102 = vpack.c.b16 %v100, %v99
    %vm105 = vcmask 261120
    %v107 = vsel %vm105, %v59, 0
    %109 = vmatprep.subr.bf16.mxu0 0
    %110 = vmatpush1.bf16.msra.mxu0 0
    %111 = vmatprep.subr.bf16.mxu0 0
    %112 = vmatpush1.bf16.msra.mxu0 0
    %113 = vmatprep.subr.bf16.mxu0 0
    %114 = vmatpush1.bf16.msra.mxu0 0
    %115 = vmatprep.subr.bf16.mxu0 0
    %116 = vmatpush1.bf16.msra.mxu0 0
    %117 = vmatprep.subr.bf16.mxu0 0
    %118 = vmatpush1.bf16.msra.mxu0 0
    %119 = vmatprep.subr.bf16.mxu0 0
    %120 = vmatpush1.bf16.msra.mxu0 0
    %121 = vmatprep.subr.bf16.mxu0 0
    %122 = vmatpush1.bf16.msra.mxu0 %v102
    %123 = vmatprep.subr.bf16.mxu0 0
    %124 = vmatpush1.bf16.msra.mxu0 %v101
    %125 = vmatprep.subr.bf16.mxu0 0
    %126 = vmatpush2.bf16.msra.mxu0 0
    %127 = vmatprep.subr.bf16.mxu0 0
    %128 = vmatpush2.bf16.msra.mxu0 0
    %129 = vmatprep.subr.bf16.mxu0 0
    %130 = vmatpush2.bf16.msra.mxu0 0
    %131 = vmatprep.subr.bf16.mxu0 0
    %132 = vmatpush2.bf16.msra.mxu0 0
    %133 = vmatprep.subr.bf16.mxu0 0
    %134 = vmatpush2.bf16.msra.mxu0 0
    %135 = vmatprep.subr.bf16.mxu0 0
    %136 = vmatpush2.bf16.msra.mxu0 0
    %137 = vmatprep.subr.bf16.mxu0 0
    %138 = vmatpush2.bf16.msra.mxu0 0
    %139 = vmatprep.subr.bf16.mxu0 0
    %140 = vmatpush2.bf16.msra.mxu0 0
    %141 = vmatprep.mubr.bf16.mxu0 0
    %142 = vmatmul.mubr.bf16.gmra.mxu0 %v107
    %v143 = vpop.f32.mrf.mxu0
    %v144 = vadd.f32 0.0, %v143
    %v145 = vpop.f32.mrf.mxu0
    %v146 = vpop.f32.mrf.mxu0
    %v147 = vadd.f32 0.0, %v146
    %v148 = vpop.f32.mrf.mxu0
    %149 = vdwg.mxu0
    %v154 = vunpack.c.l.b16 %v64
    %v155 = vunpack.c.l.b16 %v65
    %v156 = vunpack.c.l.b16 %v66
    %v157 = vunpack.c.l.b16 %v67
    %v158 = vpack.c.b16 %v155, %v154
    %v159 = vpack.c.b16 %v157, %v156
    %162 = vmatprep.subr.bf16.mxu0 0
    %163 = vmatpush1.bf16.msra.mxu0 0
    %164 = vmatprep.subr.bf16.mxu0 0
    %165 = vmatpush1.bf16.msra.mxu0 0
    %166 = vmatprep.subr.bf16.mxu0 0
    %167 = vmatpush1.bf16.msra.mxu0 0
    %168 = vmatprep.subr.bf16.mxu0 0
    %169 = vmatpush1.bf16.msra.mxu0 0
    %170 = vmatprep.subr.bf16.mxu0 0
    %171 = vmatpush1.bf16.msra.mxu0 0
    %172 = vmatprep.subr.bf16.mxu0 0
    %173 = vmatpush1.bf16.msra.mxu0 0
    %174 = vmatprep.subr.bf16.mxu0 0
    %175 = vmatpush1.bf16.msra.mxu0 %v159
    %176 = vmatprep.subr.bf16.mxu0 0
    %177 = vmatpush1.bf16.msra.mxu0 %v158
    %178 = vmatprep.subr.bf16.mxu0 0
    %179 = vmatpush2.bf16.msra.mxu0 0
    %180 = vmatprep.subr.bf16.mxu0 0
    %181 = vmatpush2.bf16.msra.mxu0 0
    %182 = vmatprep.subr.bf16.mxu0 0
    %183 = vmatpush2.bf16.msra.mxu0 0
    %184 = vmatprep.subr.bf16.mxu0 0
    %185 = vmatpush2.bf16.msra.mxu0 0
    %186 = vmatprep.subr.bf16.mxu0 0
    %187 = vmatpush2.bf16.msra.mxu0 0
    %188 = vmatprep.subr.bf16.mxu0 0
    %189 = vmatpush2.bf16.msra.mxu0 0
    %190 = vmatprep.subr.bf16.mxu0 0
    %191 = vmatpush2.bf16.msra.mxu0 0
    %192 = vmatprep.subr.bf16.mxu0 0
    %193 = vmatpush2.bf16.msra.mxu0 0
    %194 = vmatprep.mubr.bf16.mxu0 0
    %195 = vmatmul.mubr.bf16.gmra.mxu0 %v107
    %v196 = vpop.f32.mrf.mxu0
    %v197 = vadd.f32 0.0, %v196
    %v198 = vpop.f32.mrf.mxu0
    %v199 = vpop.f32.mrf.mxu0
    %v200 = vadd.f32 0.0, %v199
    %v201 = vpop.f32.mrf.mxu0
    %202 = vdwg.mxu0
    %v207 = vunpack.c.l.b16 %v68
    %v208 = vunpack.c.l.b16 %v69
    %v209 = vunpack.c.l.b16 %v70
    %v210 = vunpack.c.l.b16 %v71
    %v211 = vpack.c.b16 %v208, %v207
    %v212 = vpack.c.b16 %v210, %v209
    %215 = vmatprep.subr.bf16.mxu0 0
    %216 = vmatpush1.bf16.msra.mxu0 0
    %217 = vmatprep.subr.bf16.mxu0 0
    %218 = vmatpush1.bf16.msra.mxu0 0
    %219 = vmatprep.subr.bf16.mxu0 0
    %220 = vmatpush1.bf16.msra.mxu0 0
    %221 = vmatprep.subr.bf16.mxu0 0
    %222 = vmatpush1.bf16.msra.mxu0 0
    %223 = vmatprep.subr.bf16.mxu0 0
    %224 = vmatpush1.bf16.msra.mxu0 0
    %225 = vmatprep.subr.bf16.mxu0 0
    %226 = vmatpush1.bf16.msra.mxu0 0
    %227 = vmatprep.subr.bf16.mxu0 0
    %228 = vmatpush1.bf16.msra.mxu0 %v212
    %229 = vmatprep.subr.bf16.mxu0 0
    %230 = vmatpush1.bf16.msra.mxu0 %v211
    %231 = vmatprep.subr.bf16.mxu0 0
    %232 = vmatpush2.bf16.msra.mxu0 0
    %233 = vmatprep.subr.bf16.mxu0 0
    %234 = vmatpush2.bf16.msra.mxu0 0
    %235 = vmatprep.subr.bf16.mxu0 0
    %236 = vmatpush2.bf16.msra.mxu0 0
    %237 = vmatprep.subr.bf16.mxu0 0
    %238 = vmatpush2.bf16.msra.mxu0 0
    %239 = vmatprep.subr.bf16.mxu0 0
    %240 = vmatpush2.bf16.msra.mxu0 0
    %241 = vmatprep.subr.bf16.mxu0 0
    %242 = vmatpush2.bf16.msra.mxu0 0
    %243 = vmatprep.subr.bf16.mxu0 0
    %244 = vmatpush2.bf16.msra.mxu0 0
    %245 = vmatprep.subr.bf16.mxu0 0
    %246 = vmatpush2.bf16.msra.mxu0 0
    %247 = vmatprep.mubr.bf16.mxu0 0
    %248 = vmatmul.mubr.bf16.gmra.mxu0 %v107
    %v249 = vpop.f32.mrf.mxu0
    %v250 = vadd.f32 0.0, %v249
    %v251 = vpop.f32.mrf.mxu0
    %v252 = vpop.f32.mrf.mxu0
    %v253 = vadd.f32 0.0, %v252
    %v254 = vpop.f32.mrf.mxu0
    %255 = vdwg.mxu0
    %v260 = vunpack.c.l.b16 %v72
    %v261 = vunpack.c.l.b16 %v73
    %v262 = vunpack.c.l.b16 %v74
    %v263 = vunpack.c.l.b16 %v75
    %v264 = vpack.c.b16 %v261, %v260
    %v265 = vpack.c.b16 %v263, %v262
    %268 = vmatprep.subr.bf16.mxu0 0
    %269 = vmatpush1.bf16.msra.mxu0 0
    %270 = vmatprep.subr.bf16.mxu0 0
    %271 = vmatpush1.bf16.msra.mxu0 0
    %272 = vmatprep.subr.bf16.mxu0 0
    %273 = vmatpush1.bf16.msra.mxu0 0
    %274 = vmatprep.subr.bf16.mxu0 0
    %275 = vmatpush1.bf16.msra.mxu0 0
    %276 = vmatprep.subr.bf16.mxu0 0
    %277 = vmatpush1.bf16.msra.mxu0 0
    %278 = vmatprep.subr.bf16.mxu0 0
    %279 = vmatpush1.bf16.msra.mxu0 0
    %280 = vmatprep.subr.bf16.mxu0 0
    %281 = vmatpush1.bf16.msra.mxu0 %v265
    %282 = vmatprep.subr.bf16.mxu0 0
    %283 = vmatpush1.bf16.msra.mxu0 %v264
    %284 = vmatprep.subr.bf16.mxu0 0
    %285 = vmatpush2.bf16.msra.mxu0 0
    %286 = vmatprep.subr.bf16.mxu0 0
    %287 = vmatpush2.bf16.msra.mxu0 0
    %288 = vmatprep.subr.bf16.mxu0 0
    %289 = vmatpush2.bf16.msra.mxu0 0
    %290 = vmatprep.subr.bf16.mxu0 0
    %291 = vmatpush2.bf16.msra.mxu0 0
    %292 = vmatprep.subr.bf16.mxu0 0
    %293 = vmatpush2.bf16.msra.mxu0 0
    %294 = vmatprep.subr.bf16.mxu0 0
    %295 = vmatpush2.bf16.msra.mxu0 0
    %296 = vmatprep.subr.bf16.mxu0 0
    %297 = vmatpush2.bf16.msra.mxu0 0
    %298 = vmatprep.subr.bf16.mxu0 0
    %299 = vmatpush2.bf16.msra.mxu0 0
    %300 = vmatprep.mubr.bf16.mxu0 0
    %301 = vmatmul.mubr.bf16.gmra.mxu0 %v107
    %v302 = vpop.f32.mrf.mxu0
    %v303 = vadd.f32 0.0, %v302
    %v304 = vpop.f32.mrf.mxu0
    %v305 = vpop.f32.mrf.mxu0
    %v306 = vadd.f32 0.0, %v305
    %v307 = vpop.f32.mrf.mxu0
    %308 = vdwg.mxu0
    %v309 = vpack.c.bf16 %v147, %v144
    %v310 = vpack.c.bf16 %v200, %v197
    %v311 = vpack.c.bf16 %v253, %v250
    %v312 = vpack.c.bf16 %v306, %v303
    %v313 = vld [vmem:[#allocation7] sm:$0xff]
    %v314 = vld [vmem:[#allocation7 + $0x8] sm:$0xff]
    %v315 = vld [vmem:[#allocation7 + $0x10] sm:$0x1]
    %v317 = vsel %vm105, %v309, 0
    %319 = vmatprep.subr.bf16.mxu0 0
    %320 = vmatpush1.bf16.xpose.msra.mxu0 0
    %321 = vmatprep.subr.bf16.mxu0 0
    %322 = vmatpush1.bf16.xpose.msra.mxu0 0
    %323 = vmatprep.subr.bf16.mxu0 0
    %324 = vmatpush1.bf16.xpose.msra.mxu0 0
    %325 = vmatprep.subr.bf16.mxu0 0
    %326 = vmatpush1.bf16.xpose.msra.mxu0 0
    %327 = vmatprep.subr.bf16.mxu0 0
    %328 = vmatpush1.bf16.xpose.msra.mxu0 0
    %329 = vmatprep.subr.bf16.mxu0 0
    %330 = vmatpush1.bf16.xpose.msra.mxu0 0
    %331 = vmatprep.subr.bf16.mxu0 0
    %332 = vmatpush1.bf16.xpose.msra.mxu0 0
    %333 = vmatprep.subr.bf16.mxu0 0
    %334 = vmatpush1.bf16.xpose.msra.mxu0 %v107
    %335 = vmatprep.subr.bf16.mxu0 0
    %336 = vmatpush2.bf16.xpose.msra.mxu0 0
    %337 = vmatprep.subr.bf16.mxu0 0
    %338 = vmatpush2.bf16.xpose.msra.mxu0 0
    %339 = vmatprep.subr.bf16.mxu0 0
    %340 = vmatpush2.bf16.xpose.msra.mxu0 0
    %341 = vmatprep.subr.bf16.mxu0 0
    %342 = vmatpush2.bf16.xpose.msra.mxu0 0
    %343 = vmatprep.subr.bf16.mxu0 0
    %344 = vmatpush2.bf16.xpose.msra.mxu0 0
    %345 = vmatprep.subr.bf16.mxu0 0
    %346 = vmatpush2.bf16.xpose.msra.mxu0 0
    %347 = vmatprep.subr.bf16.mxu0 0
    %348 = vmatpush2.bf16.xpose.msra.mxu0 0
    %349 = vmatprep.subr.bf16.mxu0 0
    %350 = vmatpush2.bf16.xpose.msra.mxu0 0
    %351 = vmatprep.mubr.bf16.mxu0 0
    %352 = vmatmul.mubr.bf16.gmra.mxu0 %v317
    %v353 = vpop.f32.mrf.mxu0
    %v354 = vadd.f32 %v313, %v353
    %v355 = vpop.f32.mrf.mxu0
    %v356 = vpop.f32.mrf.mxu0
    %v357 = vadd.f32 %v314, %v356
    %v358 = vpop.f32.mrf.mxu0
    %359 = vdwg.mxu0
    %v361 = vsel %vm105, %v310, 0
    %363 = vmatprep.subr.bf16.mxu0 0
    %364 = vmatpush1.bf16.xpose.msra.mxu0 0
    %365 = vmatprep.subr.bf16.mxu0 0
    %366 = vmatpush1.bf16.xpose.msra.mxu0 0
    %367 = vmatprep.subr.bf16.mxu0 0
    %368 = vmatpush1.bf16.xpose.msra.mxu0 0
    %369 = vmatprep.subr.bf16.mxu0 0
    %370 = vmatpush1.bf16.xpose.msra.mxu0 0
    %371 = vmatprep.subr.bf16.mxu0 0
    %372 = vmatpush1.bf16.xpose.msra.mxu0 0
    %373 = vmatprep.subr.bf16.mxu0 0
    %374 = vmatpush1.bf16.xpose.msra.mxu0 0
    %375 = vmatprep.subr.bf16.mxu0 0
    %376 = vmatpush1.bf16.xpose.msra.mxu0 0
    %377 = vmatprep.subr.bf16.mxu0 0
    %378 = vmatpush1.bf16.xpose.msra.mxu0 %v107
    %379 = vmatprep.subr.bf16.mxu0 0
    %380 = vmatpush2.bf16.xpose.msra.mxu0 0
    %381 = vmatprep.subr.bf16.mxu0 0
    %382 = vmatpush2.bf16.xpose.msra.mxu0 0
    %383 = vmatprep.subr.bf16.mxu0 0
    %384 = vmatpush2.bf16.xpose.msra.mxu0 0
    %385 = vmatprep.subr.bf16.mxu0 0
    %386 = vmatpush2.bf16.xpose.msra.mxu0 0
    %387 = vmatprep.subr.bf16.mxu0 0
    %388 = vmatpush2.bf16.xpose.msra.mxu0 0
    %389 = vmatprep.subr.bf16.mxu0 0
    %390 = vmatpush2.bf16.xpose.msra.mxu0 0
    %391 = vmatprep.subr.bf16.mxu0 0
    %392 = vmatpush2.bf16.xpose.msra.mxu0 0
    %393 = vmatprep.subr.bf16.mxu0 0
    %394 = vmatpush2.bf16.xpose.msra.mxu0 0
    %395 = vmatprep.mubr.bf16.mxu0 0
    %396 = vmatmul.mubr.bf16.gmra.mxu0 %v361
    %v397 = vpop.f32.mrf.mxu0
    %v398 = vadd.f32 %v313, %v397
    %v399 = vpop.f32.mrf.mxu0
    %v400 = vpop.f32.mrf.mxu0
    %v401 = vadd.f32 %v314, %v400
    %v402 = vpop.f32.mrf.mxu0
    %403 = vdwg.mxu0
    %v405 = vsel %vm105, %v311, 0
    %407 = vmatprep.subr.bf16.mxu0 0
    %408 = vmatpush1.bf16.xpose.msra.mxu0 0
    %409 = vmatprep.subr.bf16.mxu0 0
    %410 = vmatpush1.bf16.xpose.msra.mxu0 0
    %411 = vmatprep.subr.bf16.mxu0 0
    %412 = vmatpush1.bf16.xpose.msra.mxu0 0
    %413 = vmatprep.subr.bf16.mxu0 0
    %414 = vmatpush1.bf16.xpose.msra.mxu0 0
    %415 = vmatprep.subr.bf16.mxu0 0
    %416 = vmatpush1.bf16.xpose.msra.mxu0 0
    %417 = vmatprep.subr.bf16.mxu0 0
    %418 = vmatpush1.bf16.xpose.msra.mxu0 0
    %419 = vmatprep.subr.bf16.mxu0 0
    %420 = vmatpush1.bf16.xpose.msra.mxu0 0
    %421 = vmatprep.subr.bf16.mxu0 0
    %422 = vmatpush1.bf16.xpose.msra.mxu0 %v107
    %423 = vmatprep.subr.bf16.mxu0 0
    %424 = vmatpush2.bf16.xpose.msra.mxu0 0
    %425 = vmatprep.subr.bf16.mxu0 0
    %426 = vmatpush2.bf16.xpose.msra.mxu0 0
    %427 = vmatprep.subr.bf16.mxu0 0
    %428 = vmatpush2.bf16.xpose.msra.mxu0 0
    %429 = vmatprep.subr.bf16.mxu0 0
    %430 = vmatpush2.bf16.xpose.msra.mxu0 0
    %431 = vmatprep.subr.bf16.mxu0 0
    %432 = vmatpush2.bf16.xpose.msra.mxu0 0
    %433 = vmatprep.subr.bf16.mxu0 0
    %434 = vmatpush2.bf16.xpose.msra.mxu0 0
    %435 = vmatprep.subr.bf16.mxu0 0
    %436 = vmatpush2.bf16.xpose.msra.mxu0 0
    %437 = vmatprep.subr.bf16.mxu0 0
    %438 = vmatpush2.bf16.xpose.msra.mxu0 0
    %439 = vmatprep.mubr.bf16.mxu0 0
    %440 = vmatmul.mubr.bf16.gmra.mxu0 %v405
    %v441 = vpop.f32.mrf.mxu0
    %v442 = vadd.f32 %v313, %v441
    %v443 = vpop.f32.mrf.mxu0
    %v444 = vpop.f32.mrf.mxu0
    %v445 = vadd.f32 %v314, %v444
    %v446 = vpop.f32.mrf.mxu0
    %447 = vdwg.mxu0
    %v449 = vsel %vm105, %v312, 0
    %451 = vmatprep.subr.bf16.mxu0 0
    %452 = vmatpush1.bf16.xpose.msra.mxu0 0
    %453 = vmatprep.subr.bf16.mxu0 0
    %454 = vmatpush1.bf16.xpose.msra.mxu0 0
    %455 = vmatprep.subr.bf16.mxu0 0
    %456 = vmatpush1.bf16.xpose.msra.mxu0 0
    %457 = vmatprep.subr.bf16.mxu0 0
    %458 = vmatpush1.bf16.xpose.msra.mxu0 0
    %459 = vmatprep.subr.bf16.mxu0 0
    %460 = vmatpush1.bf16.xpose.msra.mxu0 0
    %461 = vmatprep.subr.bf16.mxu0 0
    %462 = vmatpush1.bf16.xpose.msra.mxu0 0
    %463 = vmatprep.subr.bf16.mxu0 0
    %464 = vmatpush1.bf16.xpose.msra.mxu0 0
    %465 = vmatprep.subr.bf16.mxu0 0
    %466 = vmatpush1.bf16.xpose.msra.mxu0 %v107
    %467 = vmatprep.subr.bf16.mxu0 0
    %468 = vmatpush2.bf16.xpose.msra.mxu0 0
    %469 = vmatprep.subr.bf16.mxu0 0
    %470 = vmatpush2.bf16.xpose.msra.mxu0 0
    %471 = vmatprep.subr.bf16.mxu0 0
    %472 = vmatpush2.bf16.xpose.msra.mxu0 0
    %473 = vmatprep.subr.bf16.mxu0 0
    %474 = vmatpush2.bf16.xpose.msra.mxu0 0
    %475 = vmatprep.subr.bf16.mxu0 0
    %476 = vmatpush2.bf16.xpose.msra.mxu0 0
    %477 = vmatprep.subr.bf16.mxu0 0
    %478 = vmatpush2.bf16.xpose.msra.mxu0 0
    %479 = vmatprep.subr.bf16.mxu0 0
    %480 = vmatpush2.bf16.xpose.msra.mxu0 0
    %481 = vmatprep.subr.bf16.mxu0 0
    %482 = vmatpush2.bf16.xpose.msra.mxu0 0
    %483 = vmatprep.mubr.bf16.mxu0 0
    %484 = vmatmul.mubr.bf16.gmra.mxu0 %v449
    %v485 = vpop.f32.mrf.mxu0
    %v486 = vadd.f32 %v313, %v485
    %v487 = vpop.f32.mrf.mxu0
    %v488 = vpop.f32.mrf.mxu0
    %v489 = vadd.f32 %v314, %v488
    %v490 = vpop.f32.mrf.mxu0
    %491 = vdwg.mxu0
    %vm492 = vcmask 130048
    %v493 = vsel %vm492, %v354, -inf
    %494 = vmax.xlane.f32.xlu0 %v493
    %v495 = vpop.xlane.xlu0 %494
    %v496 = vsel %vm492, %v357, -inf
    %497 = vmax.xlane.f32.xlu0 %v496
    %v498 = vpop.xlane.xlu0 %497
    %v499 = vsel %vm492, %v398, -inf
    %500 = vmax.xlane.f32.xlu0 %v499
    %v501 = vpop.xlane.xlu0 %500
    %v502 = vsel %vm492, %v401, -inf
    %503 = vmax.xlane.f32.xlu0 %v502
    %v504 = vpop.xlane.xlu0 %503
    %v505 = vsel %vm492, %v442, -inf
    %506 = vmax.xlane.f32.xlu0 %v505
    %v507 = vpop.xlane.xlu0 %506
    %v508 = vsel %vm492, %v445, -inf
    %509 = vmax.xlane.f32.xlu0 %v508
    %v510 = vpop.xlane.xlu0 %509
    %v511 = vsel %vm492, %v486, -inf
    %512 = vmax.xlane.f32.xlu0 %v511
    %v513 = vpop.xlane.xlu0 %512
    %v514 = vsel %vm492, %v489, -inf
    %515 = vmax.xlane.f32.xlu0 %v514
    %v516 = vpop.xlane.xlu0 %515
    %v517 = vsub.f32 %v354, %v495
    %v518 = vsub.f32 %v357, %v498
    %v519 = vsub.f32 %v398, %v501
    %v520 = vsub.f32 %v401, %v504
    %v521 = vsub.f32 %v442, %v507
    %v522 = vsub.f32 %v445, %v510
    %v523 = vsub.f32 %v486, %v513
    %v524 = vsub.f32 %v489, %v516
    %v525 = vmul.f32 %v517, 1.442695
    %v526 = vpow.pop %v525
    %v527 = vmul.f32 %v518, 1.442695
    %v528 = vpow.pop %v527
    %v529 = vmul.f32 %v519, 1.442695
    %v530 = vpow.pop %v529
    %v531 = vmul.f32 %v520, 1.442695
    %v532 = vpow.pop %v531
    %v533 = vmul.f32 %v521, 1.442695
    %v534 = vpow.pop %v533
    %v535 = vmul.f32 %v522, 1.442695
    %v536 = vpow.pop %v535
    %v537 = vmul.f32 %v523, 1.442695
    %v538 = vpow.pop %v537
    %v539 = vmul.f32 %v524, 1.442695
    %v540 = vpow.pop %v539
    %v541 = vsel %vm492, %v526, 0.0
    %542 = vadd.xlane.f32.xlu0 %v541
    %v543 = vpop.xlane.xlu0 %542
    %v544 = vsel %vm492, %v528, 0.0
    %545 = vadd.xlane.f32.xlu0 %v544
    %v546 = vpop.xlane.xlu0 %545
    %v547 = vsel %vm492, %v530, 0.0
    %548 = vadd.xlane.f32.xlu0 %v547
    %v549 = vpop.xlane.xlu0 %548
    %v550 = vsel %vm492, %v532, 0.0
    %551 = vadd.xlane.f32.xlu0 %v550
    %v552 = vpop.xlane.xlu0 %551
    %v553 = vsel %vm492, %v534, 0.0
    %554 = vadd.xlane.f32.xlu0 %v553
    %v555 = vpop.xlane.xlu0 %554
    %v556 = vsel %vm492, %v536, 0.0
    %557 = vadd.xlane.f32.xlu0 %v556
    %v558 = vpop.xlane.xlu0 %557
    %v559 = vsel %vm492, %v538, 0.0
    %560 = vadd.xlane.f32.xlu0 %v559
    %v561 = vpop.xlane.xlu0 %560
    %v562 = vsel %vm492, %v540, 0.0
    %563 = vadd.xlane.f32.xlu0 %v562
    %v564 = vpop.xlane.xlu0 %563
    %v565 = vrcp.pop %v543
    %v566 = vmul.f32 %v526, %v565
    %v567 = vrcp.pop %v546
    %v568 = vmul.f32 %v528, %v567
    %v569 = vrcp.pop %v549
    %v570 = vmul.f32 %v530, %v569
    %v571 = vrcp.pop %v552
    %v572 = vmul.f32 %v532, %v571
    %v573 = vrcp.pop %v555
    %v574 = vmul.f32 %v534, %v573
    %v575 = vrcp.pop %v558
    %v576 = vmul.f32 %v536, %v575
    %v577 = vrcp.pop %v561
    %v578 = vmul.f32 %v538, %v577
    %v579 = vrcp.pop %v564
    %v580 = vmul.f32 %v540, %v579
    %v585 = vunpack.c.l.b16 %v77
    %v586 = vunpack.c.l.b16 %v78
    %v587 = vunpack.c.l.b16 %v79
    %v588 = vunpack.c.l.b16 %v80
    %v589 = vpack.c.b16 %v586, %v585
    %v590 = vpack.c.b16 %v588, %v587
    %593 = vmatprep.subr.bf16.mxu0 0
    %594 = vmatpush1.bf16.msra.mxu0 0
    %595 = vmatprep.subr.bf16.mxu0 0
    %596 = vmatpush1.bf16.msra.mxu0 0
    %597 = vmatprep.subr.bf16.mxu0 0
    %598 = vmatpush1.bf16.msra.mxu0 0
    %599 = vmatprep.subr.bf16.mxu0 0
    %600 = vmatpush1.bf16.msra.mxu0 0
    %601 = vmatprep.subr.bf16.mxu0 0
    %602 = vmatpush1.bf16.msra.mxu0 0
    %603 = vmatprep.subr.bf16.mxu0 0
    %604 = vmatpush1.bf16.msra.mxu0 0
    %605 = vmatprep.subr.bf16.mxu0 0
    %606 = vmatpush1.bf16.msra.mxu0 %v590
    %607 = vmatprep.subr.bf16.mxu0 0
    %608 = vmatpush1.bf16.msra.mxu0 %v589
    %609 = vmatprep.subr.bf16.mxu0 0
    %610 = vmatpush2.bf16.msra.mxu0 0
    %611 = vmatprep.subr.bf16.mxu0 0
    %612 = vmatpush2.bf16.msra.mxu0 0
    %613 = vmatprep.subr.bf16.mxu0 0
    %614 = vmatpush2.bf16.msra.mxu0 0
    %615 = vmatprep.subr.bf16.mxu0 0
    %616 = vmatpush2.bf16.msra.mxu0 0
    %617 = vmatprep.subr.bf16.mxu0 0
    %618 = vmatpush2.bf16.msra.mxu0 0
    %619 = vmatprep.subr.bf16.mxu0 0
    %620 = vmatpush2.bf16.msra.mxu0 0
    %621 = vmatprep.subr.bf16.mxu0 0
    %622 = vmatpush2.bf16.msra.mxu0 0
    %623 = vmatprep.subr.bf16.mxu0 0
    %624 = vmatpush2.bf16.msra.mxu0 0
    %625 = vmatprep.mubr.bf16.mxu0 0
    %626 = vmatmul.mubr.bf16.gmra.mxu0 %v107
    %v627 = vpop.f32.mrf.mxu0
    %v628 = vadd.f32 0.0, %v627
    %v629 = vpop.f32.mrf.mxu0
    %v630 = vpop.f32.mrf.mxu0
    %v631 = vadd.f32 0.0, %v630
    %v632 = vpop.f32.mrf.mxu0
    %633 = vdwg.mxu0
    %v638 = vunpack.c.l.b16 %v81
    %v639 = vunpack.c.l.b16 %v82
    %v640 = vunpack.c.l.b16 %v83
    %v641 = vunpack.c.l.b16 %v84
    %v642 = vpack.c.b16 %v639, %v638
    %v643 = vpack.c.b16 %v641, %v640
    %646 = vmatprep.subr.bf16.mxu0 0
    %647 = vmatpush1.bf16.msra.mxu0 0
    %648 = vmatprep.subr.bf16.mxu0 0
    %649 = vmatpush1.bf16.msra.mxu0 0
    %650 = vmatprep.subr.bf16.mxu0 0
    %651 = vmatpush1.bf16.msra.mxu0 0
    %652 = vmatprep.subr.bf16.mxu0 0
    %653 = vmatpush1.bf16.msra.mxu0 0
    %654 = vmatprep.subr.bf16.mxu0 0
    %655 = vmatpush1.bf16.msra.mxu0 0
    %656 = vmatprep.subr.bf16.mxu0 0
    %657 = vmatpush1.bf16.msra.mxu0 0
    %658 = vmatprep.subr.bf16.mxu0 0
    %659 = vmatpush1.bf16.msra.mxu0 %v643
    %660 = vmatprep.subr.bf16.mxu0 0
    %661 = vmatpush1.bf16.msra.mxu0 %v642
    %662 = vmatprep.subr.bf16.mxu0 0
    %663 = vmatpush2.bf16.msra.mxu0 0
    %664 = vmatprep.subr.bf16.mxu0 0
    %665 = vmatpush2.bf16.msra.mxu0 0
    %666 = vmatprep.subr.bf16.mxu0 0
    %667 = vmatpush2.bf16.msra.mxu0 0
    %668 = vmatprep.subr.bf16.mxu0 0
    %669 = vmatpush2.bf16.msra.mxu0 0
    %670 = vmatprep.subr.bf16.mxu0 0
    %671 = vmatpush2.bf16.msra.mxu0 0
    %672 = vmatprep.subr.bf16.mxu0 0
    %673 = vmatpush2.bf16.msra.mxu0 0
    %674 = vmatprep.subr.bf16.mxu0 0
    %675 = vmatpush2.bf16.msra.mxu0 0
    %676 = vmatprep.subr.bf16.mxu0 0
    %677 = vmatpush2.bf16.msra.mxu0 0
    %678 = vmatprep.mubr.bf16.mxu0 0
    %679 = vmatmul.mubr.bf16.gmra.mxu0 %v107
    %v680 = vpop.f32.mrf.mxu0
    %v681 = vadd.f32 0.0, %v680
    %v682 = vpop.f32.mrf.mxu0
    %v683 = vpop.f32.mrf.mxu0
    %v684 = vadd.f32 0.0, %v683
    %v685 = vpop.f32.mrf.mxu0
    %686 = vdwg.mxu0
    %v691 = vunpack.c.l.b16 %v85
    %v692 = vunpack.c.l.b16 %v86
    %v693 = vunpack.c.l.b16 %v87
    %v694 = vunpack.c.l.b16 %v88
    %v695 = vpack.c.b16 %v692, %v691
    %v696 = vpack.c.b16 %v694, %v693
    %699 = vmatprep.subr.bf16.mxu0 0
    %700 = vmatpush1.bf16.msra.mxu0 0
    %701 = vmatprep.subr.bf16.mxu0 0
    %702 = vmatpush1.bf16.msra.mxu0 0
    %703 = vmatprep.subr.bf16.mxu0 0
    %704 = vmatpush1.bf16.msra.mxu0 0
    %705 = vmatprep.subr.bf16.mxu0 0
    %706 = vmatpush1.bf16.msra.mxu0 0
    %707 = vmatprep.subr.bf16.mxu0 0
    %708 = vmatpush1.bf16.msra.mxu0 0
    %709 = vmatprep.subr.bf16.mxu0 0
    %710 = vmatpush1.bf16.msra.mxu0 0
    %711 = vmatprep.subr.bf16.mxu0 0
    %712 = vmatpush1.bf16.msra.mxu0 %v696
    %713 = vmatprep.subr.bf16.mxu0 0
    %714 = vmatpush1.bf16.msra.mxu0 %v695
    %715 = vmatprep.subr.bf16.mxu0 0
    %716 = vmatpush2.bf16.msra.mxu0 0
    %717 = vmatprep.subr.bf16.mxu0 0
    %718 = vmatpush2.bf16.msra.mxu0 0
    %719 = vmatprep.subr.bf16.mxu0 0
    %720 = vmatpush2.bf16.msra.mxu0 0
    %721 = vmatprep.subr.bf16.mxu0 0
    %722 = vmatpush2.bf16.msra.mxu0 0
    %723 = vmatprep.subr.bf16.mxu0 0
    %724 = vmatpush2.bf16.msra.mxu0 0
    %725 = vmatprep.subr.bf16.mxu0 0
    %726 = vmatpush2.bf16.msra.mxu0 0
    %727 = vmatprep.subr.bf16.mxu0 0
    %728 = vmatpush2.bf16.msra.mxu0 0
    %729 = vmatprep.subr.bf16.mxu0 0
    %730 = vmatpush2.bf16.msra.mxu0 0
    %731 = vmatprep.mubr.bf16.mxu0 0
    %732 = vmatmul.mubr.bf16.gmra.mxu0 %v107
    %v733 = vpop.f32.mrf.mxu0
    %v734 = vadd.f32 0.0, %v733
    %v735 = vpop.f32.mrf.mxu0
    %v736 = vpop.f32.mrf.mxu0
    %v737 = vadd.f32 0.0, %v736
    %v738 = vpop.f32.mrf.mxu0
    %739 = vdwg.mxu0
    %v744 = vunpack.c.l.b16 %v89
    %v745 = vunpack.c.l.b16 %v90
    %v746 = vunpack.c.l.b16 %v91
    %v747 = vunpack.c.l.b16 %v92
    %v748 = vpack.c.b16 %v745, %v744
    %v749 = vpack.c.b16 %v747, %v746
    %752 = vmatprep.subr.bf16.mxu0 0
    %753 = vmatpush1.bf16.msra.mxu0 0
    %754 = vmatprep.subr.bf16.mxu0 0
    %755 = vmatpush1.bf16.msra.mxu0 0
    %756 = vmatprep.subr.bf16.mxu0 0
    %757 = vmatpush1.bf16.msra.mxu0 0
    %758 = vmatprep.subr.bf16.mxu0 0
    %759 = vmatpush1.bf16.msra.mxu0 0
    %760 = vmatprep.subr.bf16.mxu0 0
    %761 = vmatpush1.bf16.msra.mxu0 0
    %762 = vmatprep.subr.bf16.mxu0 0
    %763 = vmatpush1.bf16.msra.mxu0 0
    %764 = vmatprep.subr.bf16.mxu0 0
    %765 = vmatpush1.bf16.msra.mxu0 %v749
    %766 = vmatprep.subr.bf16.mxu0 0
    %767 = vmatpush1.bf16.msra.mxu0 %v748
    %768 = vmatprep.subr.bf16.mxu0 0
    %769 = vmatpush2.bf16.msra.mxu0 0
    %770 = vmatprep.subr.bf16.mxu0 0
    %771 = vmatpush2.bf16.msra.mxu0 0
    %772 = vmatprep.subr.bf16.mxu0 0
    %773 = vmatpush2.bf16.msra.mxu0 0
    %774 = vmatprep.subr.bf16.mxu0 0
    %775 = vmatpush2.bf16.msra.mxu0 0
    %776 = vmatprep.subr.bf16.mxu0 0
    %777 = vmatpush2.bf16.msra.mxu0 0
    %778 = vmatprep.subr.bf16.mxu0 0
    %779 = vmatpush2.bf16.msra.mxu0 0
    %780 = vmatprep.subr.bf16.mxu0 0
    %781 = vmatpush2.bf16.msra.mxu0 0
    %782 = vmatprep.subr.bf16.mxu0 0
    %783 = vmatpush2.bf16.msra.mxu0 0
    %784 = vmatprep.mubr.bf16.mxu0 0
    %785 = vmatmul.mubr.bf16.gmra.mxu0 %v107
    %v786 = vpop.f32.mrf.mxu0
    %v787 = vadd.f32 0.0, %v786
    %v788 = vpop.f32.mrf.mxu0
    %v789 = vpop.f32.mrf.mxu0
    %v790 = vadd.f32 0.0, %v789
    %v791 = vpop.f32.mrf.mxu0
    %792 = vdwg.mxu0
    %v793 = vpack.c.bf16 %v631, %v628
    %v794 = vpack.c.bf16 %v684, %v681
    %v795 = vpack.c.bf16 %v737, %v734
    %v796 = vpack.c.bf16 %v790, %v787
    %v797 = vpack.c.bf16 %v568, %v566
    %v798 = vpack.c.bf16 %v572, %v570
    %v799 = vpack.c.bf16 %v576, %v574
    %v800 = vpack.c.bf16 %v580, %v578
    %v802 = vsel %vm492, %v797, 0
    %804 = vmatprep.subr.bf16.mxu0 0
    %805 = vmatpush1.bf16.msra.mxu0 0
    %806 = vmatprep.subr.bf16.mxu0 0
    %807 = vmatpush1.bf16.msra.mxu0 0
    %808 = vmatprep.subr.bf16.mxu0 0
    %809 = vmatpush1.bf16.msra.mxu0 0
    %810 = vmatprep.subr.bf16.mxu0 0
    %811 = vmatpush1.bf16.msra.mxu0 0
    %812 = vmatprep.subr.bf16.mxu0 0
    %813 = vmatpush1.bf16.msra.mxu0 0
    %814 = vmatprep.subr.bf16.mxu0 0
    %815 = vmatpush1.bf16.msra.mxu0 0
    %816 = vmatprep.subr.bf16.mxu0 0
    %817 = vmatpush1.bf16.msra.mxu0 0
    %818 = vmatprep.subr.bf16.mxu0 0
    %819 = vmatpush1.bf16.msra.mxu0 %v793
    %820 = vmatprep.subr.bf16.mxu0 0
    %821 = vmatpush2.bf16.msra.mxu0 0
    %822 = vmatprep.subr.bf16.mxu0 0
    %823 = vmatpush2.bf16.msra.mxu0 0
    %824 = vmatprep.subr.bf16.mxu0 0
    %825 = vmatpush2.bf16.msra.mxu0 0
    %826 = vmatprep.subr.bf16.mxu0 0
    %827 = vmatpush2.bf16.msra.mxu0 0
    %828 = vmatprep.subr.bf16.mxu0 0
    %829 = vmatpush2.bf16.msra.mxu0 0
    %830 = vmatprep.subr.bf16.mxu0 0
    %831 = vmatpush2.bf16.msra.mxu0 0
    %832 = vmatprep.subr.bf16.mxu0 0
    %833 = vmatpush2.bf16.msra.mxu0 0
    %834 = vmatprep.subr.bf16.mxu0 0
    %835 = vmatpush2.bf16.msra.mxu0 0
    %836 = vmatprep.mubr.bf16.mxu0 0
    %837 = vmatmul.mubr.bf16.gmra.mxu0 %v802
    %v838 = vpop.f32.mrf.mxu0
    %v839 = vadd.f32 0.0, %v838
    %v840 = vpop.f32.mrf.mxu0
    %v841 = vpop.f32.mrf.mxu0
    %v842 = vadd.f32 0.0, %v841
    %v843 = vpop.f32.mrf.mxu0
    %844 = vdwg.mxu0
    %v846 = vsel %vm492, %v798, 0
    %848 = vmatprep.subr.bf16.mxu0 0
    %849 = vmatpush1.bf16.msra.mxu0 0
    %850 = vmatprep.subr.bf16.mxu0 0
    %851 = vmatpush1.bf16.msra.mxu0 0
    %852 = vmatprep.subr.bf16.mxu0 0
    %853 = vmatpush1.bf16.msra.mxu0 0
    %854 = vmatprep.subr.bf16.mxu0 0
    %855 = vmatpush1.bf16.msra.mxu0 0
    %856 = vmatprep.subr.bf16.mxu0 0
    %857 = vmatpush1.bf16.msra.mxu0 0
    %858 = vmatprep.subr.bf16.mxu0 0
    %859 = vmatpush1.bf16.msra.mxu0 0
    %860 = vmatprep.subr.bf16.mxu0 0
    %861 = vmatpush1.bf16.msra.mxu0 0
    %862 = vmatprep.subr.bf16.mxu0 0
    %863 = vmatpush1.bf16.msra.mxu0 %v794
    %864 = vmatprep.subr.bf16.mxu0 0
    %865 = vmatpush2.bf16.msra.mxu0 0
    %866 = vmatprep.subr.bf16.mxu0 0
    %867 = vmatpush2.bf16.msra.mxu0 0
    %868 = vmatprep.subr.bf16.mxu0 0
    %869 = vmatpush2.bf16.msra.mxu0 0
    %870 = vmatprep.subr.bf16.mxu0 0
    %871 = vmatpush2.bf16.msra.mxu0 0
    %872 = vmatprep.subr.bf16.mxu0 0
    %873 = vmatpush2.bf16.msra.mxu0 0
    %874 = vmatprep.subr.bf16.mxu0 0
    %875 = vmatpush2.bf16.msra.mxu0 0
    %876 = vmatprep.subr.bf16.mxu0 0
    %877 = vmatpush2.bf16.msra.mxu0 0
    %878 = vmatprep.subr.bf16.mxu0 0
    %879 = vmatpush2.bf16.msra.mxu0 0
    %880 = vmatprep.mubr.bf16.mxu0 0
    %881 = vmatmul.mubr.bf16.gmra.mxu0 %v846
    %v882 = vpop.f32.mrf.mxu0
    %v883 = vadd.f32 0.0, %v882
    %v884 = vpop.f32.mrf.mxu0
    %v885 = vpop.f32.mrf.mxu0
    %v886 = vadd.f32 0.0, %v885
    %v887 = vpop.f32.mrf.mxu0
    %888 = vdwg.mxu0
    %v890 = vsel %vm492, %v799, 0
    %892 = vmatprep.subr.bf16.mxu0 0
    %893 = vmatpush1.bf16.msra.mxu0 0
    %894 = vmatprep.subr.bf16.mxu0 0
    %895 = vmatpush1.bf16.msra.mxu0 0
    %896 = vmatprep.subr.bf16.mxu0 0
    %897 = vmatpush1.bf16.msra.mxu0 0
    %898 = vmatprep.subr.bf16.mxu0 0
    %899 = vmatpush1.bf16.msra.mxu0 0
    %900 = vmatprep.subr.bf16.mxu0 0
    %901 = vmatpush1.bf16.msra.mxu0 0
    %902 = vmatprep.subr.bf16.mxu0 0
    %903 = vmatpush1.bf16.msra.mxu0 0
    %904 = vmatprep.subr.bf16.mxu0 0
    %905 = vmatpush1.bf16.msra.mxu0 0
    %906 = vmatprep.subr.bf16.mxu0 0
    %907 = vmatpush1.bf16.msra.mxu0 %v795
    %908 = vmatprep.subr.bf16.mxu0 0
    %909 = vmatpush2.bf16.msra.mxu0 0
    %910 = vmatprep.subr.bf16.mxu0 0
    %911 = vmatpush2.bf16.msra.mxu0 0
    %912 = vmatprep.subr.bf16.mxu0 0
    %913 = vmatpush2.bf16.msra.mxu0 0
    %914 = vmatprep.subr.bf16.mxu0 0
    %915 = vmatpush2.bf16.msra.mxu0 0
    %916 = vmatprep.subr.bf16.mxu0 0
    %917 = vmatpush2.bf16.msra.mxu0 0
    %918 = vmatprep.subr.bf16.mxu0 0
    %919 = vmatpush2.bf16.msra.mxu0 0
    %920 = vmatprep.subr.bf16.mxu0 0
    %921 = vmatpush2.bf16.msra.mxu0 0
    %922 = vmatprep.subr.bf16.mxu0 0
    %923 = vmatpush2.bf16.msra.mxu0 0
    %924 = vmatprep.mubr.bf16.mxu0 0
    %925 = vmatmul.mubr.bf16.gmra.mxu0 %v890
    %v926 = vpop.f32.mrf.mxu0
    %v927 = vadd.f32 0.0, %v926
    %v928 = vpop.f32.mrf.mxu0
    %v929 = vpop.f32.mrf.mxu0
    %v930 = vadd.f32 0.0, %v929
    %v931 = vpop.f32.mrf.mxu0
    %932 = vdwg.mxu0
    %v934 = vsel %vm492, %v800, 0
    %936 = vmatprep.subr.bf16.mxu0 0
    %937 = vmatpush1.bf16.msra.mxu0 0
    %938 = vmatprep.subr.bf16.mxu0 0
    %939 = vmatpush1.bf16.msra.mxu0 0
    %940 = vmatprep.subr.bf16.mxu0 0
    %941 = vmatpush1.bf16.msra.mxu0 0
    %942 = vmatprep.subr.bf16.mxu0 0
    %943 = vmatpush1.bf16.msra.mxu0 0
    %944 = vmatprep.subr.bf16.mxu0 0
    %945 = vmatpush1.bf16.msra.mxu0 0
    %946 = vmatprep.subr.bf16.mxu0 0
    %947 = vmatpush1.bf16.msra.mxu0 0
    %948 = vmatprep.subr.bf16.mxu0 0
    %949 = vmatpush1.bf16.msra.mxu0 0
    %950 = vmatprep.subr.bf16.mxu0 0
    %951 = vmatpush1.bf16.msra.mxu0 %v796
    %952 = vmatprep.subr.bf16.mxu0 0
    %953 = vmatpush2.bf16.msra.mxu0 0
    %954 = vmatprep.subr.bf16.mxu0 0
    %955 = vmatpush2.bf16.msra.mxu0 0
    %956 = vmatprep.subr.bf16.mxu0 0
    %957 = vmatpush2.bf16.msra.mxu0 0
    %958 = vmatprep.subr.bf16.mxu0 0
    %959 = vmatpush2.bf16.msra.mxu0 0
    %960 = vmatprep.subr.bf16.mxu0 0
    %961 = vmatpush2.bf16.msra.mxu0 0
    %962 = vmatprep.subr.bf16.mxu0 0
    %963 = vmatpush2.bf16.msra.mxu0 0
    %964 = vmatprep.subr.bf16.mxu0 0
    %965 = vmatpush2.bf16.msra.mxu0 0
    %966 = vmatprep.subr.bf16.mxu0 0
    %967 = vmatpush2.bf16.msra.mxu0 0
    %968 = vmatprep.mubr.bf16.mxu0 0
    %969 = vmatmul.mubr.bf16.gmra.mxu0 %v934
    %v970 = vpop.f32.mrf.mxu0
    %v971 = vadd.f32 0.0, %v970
    %v972 = vpop.f32.mrf.mxu0
    %v973 = vpop.f32.mrf.mxu0
    %v974 = vadd.f32 0.0, %v973
    %v975 = vpop.f32.mrf.mxu0
    %976 = vdwg.mxu0
    %v977 = vsel %vm105, %v839, 0.0
    %v978 = vsel %vm105, %v883, 0.0
    %v979 = vadd.f32 %v977, %v978
    %v980 = vsel %vm105, %v927, 0.0
    %v981 = vadd.f32 %v979, %v980
    %v982 = vsel %vm105, %v971, 0.0
    %v983 = vadd.f32 %v981, %v982
    %v984 = vsel %vm105, %v842, 0.0
    %v985 = vsel %vm105, %v886, 0.0
    %v986 = vadd.f32 %v984, %v985
    %v987 = vsel %vm105, %v930, 0.0
    %v988 = vadd.f32 %v986, %v987
    %v989 = vsel %vm105, %v974, 0.0
    %v990 = vadd.f32 %v988, %v989
    %v991 = vlaneseq
    %v992 = vshrl.u32 %v991, 7
    %v993 = vsub.s32 0, %v992
    %v994 = vrot.slane %v315, %v993
    %v995 = vadd.f32 %v983, %v994
    %v996 = vadd.f32 %v990, %v994
    %997 = vst.msk [vmem:[#allocation8] sm:$0xff] %vm105, %v995
    %998 = vst.msk [vmem:[#allocation8 + $0x8] sm:$0xff] %vm105, %v996
    // Predicated region
    $region26: #{causal_self_attention.1} parent=1 // pred_check
      _
    $region27: #{causal_self_attention.1} parent=1 // pred_check_branch
      %1000 = sbr.rel (0) target = $region29
    $region28: #{causal_self_attention.1} parent=1 // pred_region
      %s1002 = ssub.s32 256, 256
      %1003 = vsyncadd [#allocation4], %s1002
      %s1004 = sshll.u32 [#allocation8], 4
      %s1005 = int_to_ptr.vmem [resolvable:$true] %s1004
      %1010 = dma.vmem_to_hbm [thread:$0]  %s1005, 256, %s3, [#allocation4], 128, 128, 8
    $region29: #{causal_self_attention.1} parent=1 // pred_fallthru
      _
    // Predicated region
    $region30: #{causal_self_attention.1} parent=1 // pred_check
      _
    $region31: #{causal_self_attention.1} parent=1 // pred_check_branch
      %1012 = sbr.rel (0) target = $region33
    $region32: #{causal_self_attention.1} parent=1 // pred_region
      %1013 = dma.done [#allocation4], 256
    $region33: #{causal_self_attention.1} parent=1 // pred_fallthru
      _
    %1014 = vsyncpa [#allocation3], 1
    %1015 = vsyncpa [#allocation6], 1
    %1016 = vsyncpa [#allocation4], 1

</llo_original>
